<compile_context>
chip_gen: v5e
topology: v5e:2x2
jax: 0.10.0
libtpu: 0.0.40
codegen_flags: <defaults>
</compile_context>

<pallas_src>
import functools

import jax
import jax.numpy as jnp
from jax.experimental import pallas as pl
from jax.experimental.pallas import tpu as pltpu

EPS = 1e-5


# ---------------------------------------------------------------------------
# Hardware-derived defaults (guarded; fall back to conservative values).
# ---------------------------------------------------------------------------
def _vmem_hard_cap():
    cap = 64 << 20
    try:
        cap = int(getattr(pltpu.get_tpu_info(), "vmem_capacity_bytes", cap)) or cap
    except Exception:
        pass
    # Headroom for Mosaic-internal scratch / double buffering:
    # -> ~104 MiB on v5e/v6e (128 MiB physical), ~40 MiB on v7x (64 MiB).
    return max(cap - (24 << 20), 32 << 20)


def _default_tile_rows():
    try:
        name = str(getattr(pltpu.get_tpu_info(), "chip_version", "")).lower()
        if "v5" in name:
            return 128      # v5e MXU is 4x128^2; larger M tiles buy nothing
    except Exception:
        pass
    return 256              # v6e / v7x


def _single_block_bytes(rows, feats):
    act = rows * feats * 4
    # x + out + ~4 compiler-materialized activation temporaries, 3 bf16
    # weights, per-feature vectors, slack.
    return 6 * act + 3 * feats * feats * 2 + 16 * feats * 4 + (1 << 20)


# ---------------------------------------------------------------------------
# Kernels
# ---------------------------------------------------------------------------
def _bn_relu_fused(h, gamma, beta):
    """Train-mode BatchNorm1d (biased var) + ReLU, single reduction pass.

    var = E[h^2] - mean^2 is fine in f32 here (post-linear activations are
    near zero mean); keep a centered two-pass form if inputs could carry
    large offsets.
    """
    mean = jnp.mean(h, axis=0, keepdims=True)
    ex2 = jnp.mean(h * h, axis=0, keepdims=True)
    var = jnp.maximum(ex2 - mean * mean, 0.0)
    scale = gamma * jax.lax.rsqrt(var + EPS)      # (1, F)
    shift = beta - mean * scale                   # (1, F)
    return jnp.maximum(h * scale + shift, 0.0)


def _decoder_fused_kernel(x_ref, w1_ref, g1_ref, be1_ref,
                          w2_ref, g2_ref, be2_ref, w3_ref, b3_ref, o_ref):
    """Whole-batch single-block path (batch small enough for VMEM)."""
    h = jnp.dot(x_ref[...].astype(jnp.bfloat16), w1_ref[...],
                preferred_element_type=jnp.float32)
    h = _bn_relu_fused(h, g1_ref[...], be1_ref[...])
    h = jnp.dot(h.astype(jnp.bfloat16), w2_ref[...],
                preferred_element_type=jnp.float32)
    h = _bn_relu_fused(h, g2_ref[...], be2_ref[...])
    h = jnp.dot(h.astype(jnp.bfloat16), w3_ref[...],
                preferred_element_type=jnp.float32)
    o_ref[...] = (h + b3_ref[...]).astype(o_ref.dtype)


def _mask_rows(a, rows_total, tile_rows):
    """Zero the out-of-range rows of a ragged last batch tile."""
    r = jax.lax.broadcasted_iota(jnp.int32, a.shape, 0)
    r = r + pl.program_id(0) * tile_rows
    return jnp.where(r < rows_total, a, 0.0)


def _partial_stats(ps_ref, h):
    s = jnp.sum(h, axis=0, keepdims=True)        # (1, F)
    ss = jnp.sum(h * h, axis=0, keepdims=True)   # (1, F)
    ps_ref[...] = jnp.concatenate([s, ss], axis=0)[None]   # (1, 2, F)


def _linear_stats_kernel(x_ref, w_ref, h_ref, ps_ref, *,
                         rows_total, tile_rows, mask):
    h = jnp.dot(x_ref[...].astype(jnp.bfloat16), w_ref[...],
                preferred_element_type=jnp.float32)
    h_ref[...] = h
    if mask:
        h = _mask_rows(h, rows_total, tile_rows)
    _partial_stats(ps_ref, h)


def _bn_linear_stats_kernel(h_ref, sc_ref, sh_ref, w_ref, o_ref, ps_ref, *,
                            rows_total, tile_rows, mask):
    a = jnp.maximum(h_ref[...] * sc_ref[...] + sh_ref[...], 0.0)
    if mask:
        a = _mask_rows(a, rows_total, tile_rows)
    h2 = jnp.dot(a.astype(jnp.bfloat16), w_ref[...],
                 preferred_element_type=jnp.float32)
    o_ref[...] = h2
    _partial_stats(ps_ref, h2)


def _bn_linear_bias_kernel(h_ref, sc_ref, sh_ref, w_ref, b_ref, o_ref):
    a = jnp.maximum(h_ref[...] * sc_ref[...] + sh_ref[...], 0.0)
    h = jnp.dot(a.astype(jnp.bfloat16), w_ref[...],
                preferred_element_type=jnp.float32)
    o_ref[...] = (h + b_ref[...]).astype(o_ref.dtype)


# ---------------------------------------------------------------------------
# Wrapper paths
# ---------------------------------------------------------------------------
def _stats_to_scale_shift(ps, gamma, beta, rows):
    """Tiny (F,)-sized finalization of the per-tile partial BN stats."""
    s = jnp.sum(ps[:, 0, :], axis=0)
    ss = jnp.sum(ps[:, 1, :], axis=0)
    mean = s / rows
    var = jnp.maximum(ss / rows - mean * mean, 0.0)
    scale = gamma * jax.lax.rsqrt(var + EPS)      # (1, F)
    shift = beta - mean * scale                   # (1, F)
    return scale, shift


def _decoder_single_block(x2d, prep, hard_cap):
    B, F = x2d.shape
    w1, w2, w3, g1, be1, g2, be2, b3 = prep
    vmem_limit = int(min(max(2 * _single_block_bytes(B, F), 4 << 20), hard_cap))
    vmem = pl.BlockSpec(memory_space=pltpu.MemorySpace.VMEM)
    return pl.pallas_call(
        _decoder_fused_kernel,
        out_shape=jax.ShapeDtypeStruct((B, F), jnp.float32),
        in_specs=[vmem] * 9,
        out_specs=vmem,
        compiler_params=pltpu.CompilerParams(vmem_limit_bytes=vmem_limit),
    )(x2d, w1, g1, be1, w2, g2, be2, w3, b3)


def _decoder_tiled(x2d, prep, tile_rows, hard_cap):
    B, F = x2d.shape
    w1, w2, w3, g1, be1, g2, be2, b3 = prep
    nt = -(-B // tile_rows)
    needs_mask = (B % tile_rows) != 0

    row_spec = pl.BlockSpec((tile_rows, F), lambda i: (i, 0))
    w_spec = pl.BlockSpec((F, F), lambda i: (0, 0))
    vec_spec = pl.BlockSpec((1, F), lambda i: (0, 0))
    ps_spec = pl.BlockSpec((1, 2, F), lambda i: (i, 0, 0))

    act = tile_rows * F * 4
    est = 8 * act + 2 * F * F * 2 + 16 * F * 4 + (1 << 20)
    vmem_limit = int(min(max(2 * est, 8 << 20), hard_cap))
    cparams = pltpu.CompilerParams(
        dimension_semantics=("parallel",), vmem_limit_bytes=vmem_limit)

    h_shape = jax.ShapeDtypeStruct((B, F), jnp.float32)
    ps_shape = jax.ShapeDtypeStruct((nt, 2, F), jnp.float32)

    # Pass 1: h1 = x @ W1, per-tile partial BN1 stats.
    h1, ps1 = pl.pallas_call(
        functools.partial(_linear_stats_kernel, rows_total=B,
                          tile_rows=tile_rows, mask=needs_mask),
        grid=(nt,),
        in_specs=[row_spec, w_spec],
        out_specs=(row_spec, ps_spec),
        out_shape=(h_shape, ps_shape),
        compiler_params=cparams,
    )(x2d, w1)
    sc1, sh1 = _stats_to_scale_shift(ps1, g1, be1, B)

    # Pass 2: ReLU(BN1(h1)) @ W2, per-tile partial BN2 stats.
    h2, ps2 = pl.pallas_call(
        functools.partial(_bn_linear_stats_kernel, rows_total=B,
                          tile_rows=tile_rows, mask=needs_mask),
        grid=(nt,),
        in_specs=[row_spec, vec_spec, vec_spec, w_spec],
        out_specs=(row_spec, ps_spec),
        out_shape=(h_shape, ps_shape),
        compiler_params=cparams,
    )(h1, sc1, sh1, w2)
    sc2, sh2 = _stats_to_scale_shift(ps2, g2, be2, B)

    # Pass 3: ReLU(BN2(h2)) @ W3 + b3.
    return pl.pallas_call(
        _bn_linear_bias_kernel,
        grid=(nt,),
        in_specs=[row_spec, vec_spec, vec_spec, w_spec, vec_spec],
        out_specs=row_spec,
        out_shape=jax.ShapeDtypeStruct((B, F), jnp.float32),
        compiler_params=cparams,
    )(h2, sc2, sh2, w3, b3)


# ---------------------------------------------------------------------------
# Public API
# ---------------------------------------------------------------------------
def prepare_params(params):
    """One-time parameter prep, hoisted out of the per-call hot path:
    bf16 weights for the MXU; Linear biases b1/b2 dropped (exactly cancelled
    by training-mode BatchNorm mean subtraction -- NOT valid for eval-mode
    running stats); BN affine params and b3 kept as (1, F) f32."""
    (w1, b1, g1, be1, w2, b2, g2, be2, w3, b3) = params
    del b1, b2
    F = w1.shape[0]

    def vec(v):
        return jnp.asarray(v, jnp.float32).reshape(1, F)

    return (jnp.asarray(w1, jnp.bfloat16), jnp.asarray(w2, jnp.bfloat16),
            jnp.asarray(w3, jnp.bfloat16),
            vec(g1), vec(be1), vec(g2), vec(be2), vec(b3))


@functools.partial(jax.jit, static_argnames=("N", "tile_rows", "force_tiled"))
def decoder_forward(x, prep, N, *, tile_rows=None, force_tiled=False):
    """x: any shape that flattens to (-1, 2N).  Returns (-1, N, 2) f32."""
    F = 2 * N
    x2d = x.reshape(-1, F)
    if x2d.dtype != jnp.float32:
        x2d = x2d.astype(jnp.float32)
    B = x2d.shape[0]
    # TODO(synk): with B < 16 the MXU is almost idle; batch several decoder
    # invocations into one call before any further in-kernel tuning.

    hard_cap = _vmem_hard_cap()
    tr = int(tile_rows) if tile_rows is not None else _default_tile_rows()

    if force_tiled or 2 * _single_block_bytes(B, F) > hard_cap:
        out = _decoder_tiled(x2d, prep, tr, hard_cap)
    else:
        out = _decoder_single_block(x2d, prep, hard_cap)
    return out.reshape(-1, N, 2)


# ---------------------------------------------------------------------------
# Synthetic params + pure-JAX reference
# ---------------------------------------------------------------------------
def init_params(key, N):
    """Deterministic synthetic parameters matching Decoder(N)'s shapes."""
    F = 2 * N
    keys = jax.random.split(key, 10)
    scale = 1.0 / jnp.sqrt(jnp.float32(F))

    def lin(k):
        kw, kb = jax.random.split(k)
        w = jax.random.uniform(kw, (F, F), jnp.float32, -scale, scale)  # (in,out)
        b = jax.random.uniform(kb, (1, F), jnp.float32, -scale, scale)
        return w, b

    w1, b1 = lin(keys[0])
    w2, b2 = lin(keys[1])
    w3, b3 = lin(keys[2])
    g1 = 1.0 + 0.1 * jax.random.normal(keys[3], (1, F), jnp.float32)
    be1 = 0.1 * jax.random.normal(keys[4], (1, F), jnp.float32)
    g2 = 1.0 + 0.1 * jax.random.normal(keys[5], (1, F), jnp.float32)
    be2 = 0.1 * jax.random.normal(keys[6], (1, F), jnp.float32)
    return (w1, b1, g1, be1, w2, b2, g2, be2, w3, b3)


def decoder_ref(x, params, N):
    """Pure-JAX reference with the module's semantics (keeps b1/b2, centered
    two-pass BN) and the same bf16-operand / f32-accumulate matmuls."""
    F = 2 * N
    (w1, b1, g1, be1, w2, b2, g2, be2, w3, b3) = params
    h = x.reshape(-1, F).astype(jnp.float32)

    def mm(a, w):
        return jnp.dot(a.astype(jnp.bfloat16), w.astype(jnp.bfloat16),
                       preferred_element_type=jnp.float32)

    def block(h, w, b, g, be):
        h = mm(h, w) + b
        m = jnp.mean(h, axis=0, keepdims=True)
        v = jnp.mean((h - m) ** 2, axis=0, keepdims=True)
        return jnp.maximum((h - m) * jax.lax.rsqrt(v + EPS) * g + be, 0.0)

    h = block(h, w1, b1, g1, be1)
    h = block(h, w2, b2, g2, be2)
    h = mm(h, w3) + b3
    return h.reshape(-1, N, 2)


if __name__ == "__main__":
    N = 16                     # Linear(2N, 2N) => 32-wide features
    key = jax.random.PRNGKey(0)
    kx1, kx2, kp = jax.random.split(key, 3)

    params = init_params(kp, N)
    prep = prepare_params(params)       # hoisted out of the hot path

    # 1) Small batch -> fused single-block path.
    B1 = 8
    x1 = jax.random.normal(kx1, (B1, 2 * N), jnp.float32)
    y1 = jax.block_until_ready(decoder_forward(x1, prep, N))
    r1 = decoder_ref(x1, params, N)
    assert y1.shape == (B1, N, 2), y1.shape
    assert jnp.allclose(y1, r1, atol=2e-2, rtol=2e-2), float(jnp.max(jnp.abs(y1 - r1)))

    # 2) Larger batch, forced through the batch-tiled two-pass-BN pipeline
    #    (ragged last tile exercises the stats masking).
    B2 = 300
    x2 = jax.random.normal(kx2, (B2, 2 * N), jnp.float32)
    y2 = jax.block_until_ready(
        decoder_forward(x2, prep, N, tile_rows=128, force_tiled=True))
    r2 = decoder_ref(x2, params, N)
    assert y2.shape == (B2, N, 2), y2.shape
    assert jnp.allclose(y2, r2, atol=2e-2, rtol=2e-2), float(jnp.max(jnp.abs(y2 - r2)))

    print("KERNEL_OK")
</pallas_src>

<mosaic_0001>
module attributes {stable_mosaic.version = 11 : i64} {
  func.func @_decoder_fused_kernel(%arg0: memref<8x32xf32, #tpu.memory_space<vmem>>, %arg1: memref<32x32xbf16, #tpu.memory_space<vmem>>, %arg2: memref<1x32xf32, #tpu.memory_space<vmem>>, %arg3: memref<1x32xf32, #tpu.memory_space<vmem>>, %arg4: memref<32x32xbf16, #tpu.memory_space<vmem>>, %arg5: memref<1x32xf32, #tpu.memory_space<vmem>>, %arg6: memref<1x32xf32, #tpu.memory_space<vmem>>, %arg7: memref<32x32xbf16, #tpu.memory_space<vmem>>, %arg8: memref<1x32xf32, #tpu.memory_space<vmem>>, %arg9: memref<8x32xf32, #tpu.memory_space<vmem>>) attributes {dimension_semantics = [], scalar_prefetch = 0 : i64, scratch_operands = 0 : i64, tpu.core_type = #tpu.core_type<tc>} {
    %c0 = arith.constant 0 : index
    %c0_0 = arith.constant 0 : index
    %0 = vector.load %arg0[%c0, %c0_0] : memref<8x32xf32, #tpu.memory_space<vmem>>, vector<8x32xf32>
    %1 = arith.truncf %0 : vector<8x32xf32> to vector<8x32xbf16>
    %c0_1 = arith.constant 0 : index
    %c0_2 = arith.constant 0 : index
    %2 = vector.load %arg1[%c0_1, %c0_2] : memref<32x32xbf16, #tpu.memory_space<vmem>>, vector<32x32xbf16>
    %cst = arith.constant dense<0.000000e+00> : vector<8x32xf32>
    %3 = tpu.matmul %1, %2, %cst {dimension_numbers = #tpu.dot_dimension_numbers<[1], [0], [0], [1], [0, 0, 1, 1], [], []>} : vector<8x32xbf16>, vector<32x32xbf16>, vector<8x32xf32> -> vector<8x32xf32>
    %c0_3 = arith.constant 0 : index
    %c0_4 = arith.constant 0 : index
    %4 = vector.load %arg2[%c0_3, %c0_4] : memref<1x32xf32, #tpu.memory_space<vmem>>, vector<1x32xf32>
    %c0_5 = arith.constant 0 : index
    %c0_6 = arith.constant 0 : index
    %5 = vector.load %arg3[%c0_5, %c0_6] : memref<1x32xf32, #tpu.memory_space<vmem>>, vector<1x32xf32>
    %cst_7 = arith.constant dense<0.000000e+00> : vector<32xf32>
    %6 = vector.multi_reduction <add>, %3, %cst_7 [0] : vector<8x32xf32> to vector<32xf32>
    %7 = vector.shape_cast %6 : vector<32xf32> to vector<1x32xf32>
    %cst_8 = arith.constant 8.000000e+00 : f32
    %8 = vector.broadcast %cst_8 : f32 to vector<1x32xf32>
    %9 = arith.divf %7, %8 : vector<1x32xf32>
    %10 = arith.mulf %3, %3 : vector<8x32xf32>
    %cst_9 = arith.constant dense<0.000000e+00> : vector<32xf32>
    %11 = vector.multi_reduction <add>, %10, %cst_9 [0] : vector<8x32xf32> to vector<32xf32>
    %12 = vector.shape_cast %11 : vector<32xf32> to vector<1x32xf32>
    %cst_10 = arith.constant 8.000000e+00 : f32
    %13 = vector.broadcast %cst_10 : f32 to vector<1x32xf32>
    %14 = arith.divf %12, %13 : vector<1x32xf32>
    %15 = arith.mulf %9, %9 : vector<1x32xf32>
    %16 = arith.subf %14, %15 : vector<1x32xf32>
    %cst_11 = arith.constant 0.000000e+00 : f32
    %17 = vector.broadcast %cst_11 : f32 to vector<1x32xf32>
    %18 = arith.maximumf %16, %17 : vector<1x32xf32>
    %cst_12 = arith.constant 9.99999974E-6 : f32
    %19 = vector.broadcast %cst_12 : f32 to vector<1x32xf32>
    %20 = arith.addf %18, %19 : vector<1x32xf32>
    %21 = math.rsqrt %20 : vector<1x32xf32>
    %22 = arith.mulf %4, %21 : vector<1x32xf32>
    %23 = arith.mulf %9, %22 : vector<1x32xf32>
    %24 = arith.subf %5, %23 : vector<1x32xf32>
    %25 = vector.broadcast %22 : vector<1x32xf32> to vector<8x32xf32>
    %26 = arith.mulf %3, %25 : vector<8x32xf32>
    %27 = vector.broadcast %24 : vector<1x32xf32> to vector<8x32xf32>
    %28 = arith.addf %26, %27 : vector<8x32xf32>
    %cst_13 = arith.constant 0.000000e+00 : f32
    %29 = vector.broadcast %cst_13 : f32 to vector<8x32xf32>
    %30 = arith.maximumf %28, %29 : vector<8x32xf32>
    %31 = arith.truncf %30 : vector<8x32xf32> to vector<8x32xbf16>
    %c0_14 = arith.constant 0 : index
    %c0_15 = arith.constant 0 : index
    %32 = vector.load %arg4[%c0_14, %c0_15] : memref<32x32xbf16, #tpu.memory_space<vmem>>, vector<32x32xbf16>
    %cst_16 = arith.constant dense<0.000000e+00> : vector<8x32xf32>
    %33 = tpu.matmul %31, %32, %cst_16 {dimension_numbers = #tpu.dot_dimension_numbers<[1], [0], [0], [1], [0, 0, 1, 1], [], []>} : vector<8x32xbf16>, vector<32x32xbf16>, vector<8x32xf32> -> vector<8x32xf32>
    %c0_17 = arith.constant 0 : index
    %c0_18 = arith.constant 0 : index
    %34 = vector.load %arg5[%c0_17, %c0_18] : memref<1x32xf32, #tpu.memory_space<vmem>>, vector<1x32xf32>
    %c0_19 = arith.constant 0 : index
    %c0_20 = arith.constant 0 : index
    %35 = vector.load %arg6[%c0_19, %c0_20] : memref<1x32xf32, #tpu.memory_space<vmem>>, vector<1x32xf32>
    %cst_21 = arith.constant dense<0.000000e+00> : vector<32xf32>
    %36 = vector.multi_reduction <add>, %33, %cst_21 [0] : vector<8x32xf32> to vector<32xf32>
    %37 = vector.shape_cast %36 : vector<32xf32> to vector<1x32xf32>
    %cst_22 = arith.constant 8.000000e+00 : f32
    %38 = vector.broadcast %cst_22 : f32 to vector<1x32xf32>
    %39 = arith.divf %37, %38 : vector<1x32xf32>
    %40 = arith.mulf %33, %33 : vector<8x32xf32>
    %cst_23 = arith.constant dense<0.000000e+00> : vector<32xf32>
    %41 = vector.multi_reduction <add>, %40, %cst_23 [0] : vector<8x32xf32> to vector<32xf32>
    %42 = vector.shape_cast %41 : vector<32xf32> to vector<1x32xf32>
    %cst_24 = arith.constant 8.000000e+00 : f32
    %43 = vector.broadcast %cst_24 : f32 to vector<1x32xf32>
    %44 = arith.divf %42, %43 : vector<1x32xf32>
    %45 = arith.mulf %39, %39 : vector<1x32xf32>
    %46 = arith.subf %44, %45 : vector<1x32xf32>
    %cst_25 = arith.constant 0.000000e+00 : f32
    %47 = vector.broadcast %cst_25 : f32 to vector<1x32xf32>
    %48 = arith.maximumf %46, %47 : vector<1x32xf32>
    %cst_26 = arith.constant 9.99999974E-6 : f32
    %49 = vector.broadcast %cst_26 : f32 to vector<1x32xf32>
    %50 = arith.addf %48, %49 : vector<1x32xf32>
    %51 = math.rsqrt %50 : vector<1x32xf32>
    %52 = arith.mulf %34, %51 : vector<1x32xf32>
    %53 = arith.mulf %39, %52 : vector<1x32xf32>
    %54 = arith.subf %35, %53 : vector<1x32xf32>
    %55 = vector.broadcast %52 : vector<1x32xf32> to vector<8x32xf32>
    %56 = arith.mulf %33, %55 : vector<8x32xf32>
    %57 = vector.broadcast %54 : vector<1x32xf32> to vector<8x32xf32>
    %58 = arith.addf %56, %57 : vector<8x32xf32>
    %cst_27 = arith.constant 0.000000e+00 : f32
    %59 = vector.broadcast %cst_27 : f32 to vector<8x32xf32>
    %60 = arith.maximumf %58, %59 : vector<8x32xf32>
    %61 = arith.truncf %60 : vector<8x32xf32> to vector<8x32xbf16>
    %c0_28 = arith.constant 0 : index
    %c0_29 = arith.constant 0 : index
    %62 = vector.load %arg7[%c0_28, %c0_29] : memref<32x32xbf16, #tpu.memory_space<vmem>>, vector<32x32xbf16>
    %cst_30 = arith.constant dense<0.000000e+00> : vector<8x32xf32>
    %63 = tpu.matmul %61, %62, %cst_30 {dimension_numbers = #tpu.dot_dimension_numbers<[1], [0], [0], [1], [0, 0, 1, 1], [], []>} : vector<8x32xbf16>, vector<32x32xbf16>, vector<8x32xf32> -> vector<8x32xf32>
    %c0_31 = arith.constant 0 : index
    %c0_32 = arith.constant 0 : index
    %64 = vector.load %arg8[%c0_31, %c0_32] : memref<1x32xf32, #tpu.memory_space<vmem>>, vector<1x32xf32>
    %65 = vector.broadcast %64 : vector<1x32xf32> to vector<8x32xf32>
    %66 = arith.addf %63, %65 : vector<8x32xf32>
    %c0_33 = arith.constant 0 : index
    %c0_34 = arith.constant 0 : index
    %67 = vector.load %arg9[%c0_33, %c0_34] : memref<8x32xf32, #tpu.memory_space<vmem>>, vector<8x32xf32>
    tpu.vector_store %arg9[%c0_33, %c0_34], %66 {strides = array<i32>} : memref<8x32xf32, #tpu.memory_space<vmem>>, vector<8x32xf32>,
    return
  }
}

</mosaic_0001>

<llo_original>
// kernel: decoder_forward.1
$region0: #{decoder_forward.1}
  #allocation0 [shape = 'u32[]', space=smem, size = 0x4, offset = 0x4, fixed_abs, tag = 'smem constant byte address 0x4 - core index']
  #allocation1 [shape = 'u32[72,128]{1,0:T(1,128)}', space=vmem, size = 0x9000, scoped, tag = 'internal scratch']
  %s0 = inlined_call_operand.hbm [shape: f32[8,32], index: 0, kind: input, shape index: {}]
  %s1 = inlined_call_operand.hbm [shape: bf16[32,32], index: 1, kind: input, shape index: {}]
  %s2 = inlined_call_operand.vmem [shape: f32[1,32], index: 2, kind: input, shape index: {}]
  %s3 = inlined_call_operand.vmem [shape: f32[1,32], index: 3, kind: input, shape index: {}]
  %s4 = inlined_call_operand.hbm [shape: bf16[32,32], index: 4, kind: input, shape index: {}]
  %s5 = inlined_call_operand.vmem [shape: f32[1,32], index: 5, kind: input, shape index: {}]
  %s6 = inlined_call_operand.vmem [shape: f32[1,32], index: 6, kind: input, shape index: {}]
  %s7 = inlined_call_operand.hbm [shape: bf16[32,32], index: 7, kind: input, shape index: {}]
  %s8 = inlined_call_operand.vmem [shape: f32[1,32], index: 8, kind: input, shape index: {}]
  %s9 = inlined_call_operand.vmem [shape: f32[8,32], index: 9, kind: output, shape index: {}]
  %s10 = sld [smem:[#allocation0]]
  $region62: #{decoder_forward.1} parent=0
    _
  %s12 = ssub.s32 1, %s10
  %s13 = scalar_select 0, %s12, %s10
  $region1: #{decoder_forward.1} parent=0
    #allocation2 [shape = 'u8[4096]{0}', space=vmem, size = 0x1000, scoped, tag = 'input window, operand 0, single buffered']
    #allocation3 [shape = 's32[1]{0}', space=sflag, size = 0x4, scoped, tag = 'scoped memory for decoder_forward.1']
    #allocation4 [shape = 'u8[8192]{0}', space=vmem, size = 0x2000, scoped, tag = 'input window, operand 1, single buffered']
    #allocation5 [shape = 's32[1]{0}', space=sflag, size = 0x4, scoped, tag = 'scoped memory for decoder_forward.1']
    #allocation6 [shape = 'u8[8192]{0}', space=vmem, size = 0x2000, scoped, tag = 'input window, operand 4, single buffered']
    #allocation7 [shape = 'u8[8192]{0}', space=vmem, size = 0x2000, scoped, tag = 'input window, operand 7, single buffered']
    #allocation8 [shape = 's32[1]{0}', space=sflag, size = 0x4, scoped, tag = 'scoped memory for decoder_forward.1']
    %14 = vsyncpa [#allocation3], 0
    %15 = vsyncpa [#allocation5], 0
    %16 = vsyncpa [#allocation8], 0
    // Predicated region
    $region2: #{decoder_forward.1} parent=1 // pred_check
      _
    $region3: #{decoder_forward.1} parent=1 // pred_check_branch
      %18 = sbr.rel (0) target = $region5
    $region4: #{decoder_forward.1} parent=1 // pred_region
      %20 = vsyncadd [#allocation3], 0
      %s22 = sshll.u32 %s0, 4
      %s23 = int_to_ptr.hbm [resolvable:$true] %s22
      %s24 = sshll.u32 [#allocation2], 4
      %s25 = int_to_ptr.vmem [resolvable:$true] %s24
      %27 = dma.hbm_to_vmem [thread:$0]  %s23, 128, %s25, [#allocation3]
    $region5: #{decoder_forward.1} parent=1 // pred_fallthru
      _
    // Predicated region
    $region6: #{decoder_forward.1} parent=1 // pred_check
      _
    $region7: #{decoder_forward.1} parent=1 // pred_check_branch
      %29 = sbr.rel (0) target = $region9
    $region8: #{decoder_forward.1} parent=1 // pred_region
      %31 = vsyncadd [#allocation5], 0
      %s32 = sshll.u32 %s1, 4
      %s33 = int_to_ptr.hbm [resolvable:$true] %s32
      %s34 = sshll.u32 [#allocation4], 4
      %s35 = int_to_ptr.vmem [resolvable:$true] %s34
      %40 = dma.hbm_to_vmem [thread:$0]  %s33, 256, %s35, [#allocation5], 64, 64, 4
    $region9: #{decoder_forward.1} parent=1 // pred_fallthru
      _
    // Predicated region
    $region10: #{decoder_forward.1} parent=1 // pred_check
      _
    $region11: #{decoder_forward.1} parent=1 // pred_check_branch
      %42 = sbr.rel (0) target = $region13
    $region12: #{decoder_forward.1} parent=1 // pred_region
      _
    $region13: #{decoder_forward.1} parent=1 // pred_fallthru
      _
    // Predicated region
    $region14: #{decoder_forward.1} parent=1 // pred_check
      _
    $region15: #{decoder_forward.1} parent=1 // pred_check_branch
      %44 = sbr.rel (0) target = $region17
    $region16: #{decoder_forward.1} parent=1 // pred_region
      _
    $region17: #{decoder_forward.1} parent=1 // pred_fallthru
      _
    // Predicated region
    $region18: #{decoder_forward.1} parent=1 // pred_check
      _
    $region19: #{decoder_forward.1} parent=1 // pred_check_branch
      %46 = sbr.rel (0) target = $region21
    $region20: #{decoder_forward.1} parent=1 // pred_region
      %48 = vsyncadd [#allocation5], 0
      %s49 = sshll.u32 %s4, 4
      %s50 = int_to_ptr.hbm [resolvable:$true] %s49
      %s51 = sshll.u32 [#allocation6], 4
      %s52 = int_to_ptr.vmem [resolvable:$true] %s51
      %57 = dma.hbm_to_vmem [thread:$0]  %s50, 256, %s52, [#allocation5], 64, 64, 4
    $region21: #{decoder_forward.1} parent=1 // pred_fallthru
      _
    // Predicated region
    $region22: #{decoder_forward.1} parent=1 // pred_check
      _
    $region23: #{decoder_forward.1} parent=1 // pred_check_branch
      %59 = sbr.rel (0) target = $region25
    $region24: #{decoder_forward.1} parent=1 // pred_region
      _
    $region25: #{decoder_forward.1} parent=1 // pred_fallthru
      _
    // Predicated region
    $region26: #{decoder_forward.1} parent=1 // pred_check
      _
    $region27: #{decoder_forward.1} parent=1 // pred_check_branch
      %61 = sbr.rel (0) target = $region29
    $region28: #{decoder_forward.1} parent=1 // pred_region
      _
    $region29: #{decoder_forward.1} parent=1 // pred_fallthru
      _
    // Predicated region
    $region30: #{decoder_forward.1} parent=1 // pred_check
      _
    $region31: #{decoder_forward.1} parent=1 // pred_check_branch
      %63 = sbr.rel (0) target = $region33
    $region32: #{decoder_forward.1} parent=1 // pred_region
      %65 = vsyncadd [#allocation8], 0
      %s66 = sshll.u32 %s7, 4
      %s67 = int_to_ptr.hbm [resolvable:$true] %s66
      %s68 = sshll.u32 [#allocation7], 4
      %s69 = int_to_ptr.vmem [resolvable:$true] %s68
      %74 = dma.hbm_to_vmem [thread:$0]  %s67, 256, %s69, [#allocation8], 64, 64, 4
    $region33: #{decoder_forward.1} parent=1 // pred_fallthru
      _
    // Predicated region
    $region34: #{decoder_forward.1} parent=1 // pred_check
      _
    $region35: #{decoder_forward.1} parent=1 // pred_check_branch
      %76 = sbr.rel (0) target = $region37
    $region36: #{decoder_forward.1} parent=1 // pred_region
      _
    $region37: #{decoder_forward.1} parent=1 // pred_fallthru
      _
    // Predicated region
    $region38: #{decoder_forward.1} parent=1 // pred_check
      _
    $region39: #{decoder_forward.1} parent=1 // pred_check_branch
      %78 = sbr.rel (0) target = $region41
    $region40: #{decoder_forward.1} parent=1 // pred_region
      %80 = dma.done [#allocation3], 128
    $region41: #{decoder_forward.1} parent=1 // pred_fallthru
      _
    // Predicated region
    $region42: #{decoder_forward.1} parent=1 // pred_check
      _
    $region43: #{decoder_forward.1} parent=1 // pred_check_branch
      %82 = sbr.rel (0) target = $region45
    $region44: #{decoder_forward.1} parent=1 // pred_region
      %84 = dma.done [#allocation5], 256
    $region45: #{decoder_forward.1} parent=1 // pred_fallthru
      _
    // Predicated region
    $region46: #{decoder_forward.1} parent=1 // pred_check
      _
    $region47: #{decoder_forward.1} parent=1 // pred_check_branch
      %86 = sbr.rel (0) target = $region49
    $region48: #{decoder_forward.1} parent=1 // pred_region
      %88 = dma.done [#allocation5], 256
    $region49: #{decoder_forward.1} parent=1 // pred_fallthru
      _
    // Predicated region
    $region50: #{decoder_forward.1} parent=1 // pred_check
      _
    $region51: #{decoder_forward.1} parent=1 // pred_check_branch
      %90 = sbr.rel (0) target = $region53
    $region52: #{decoder_forward.1} parent=1 // pred_region
      %92 = dma.done [#allocation8], 256
    $region53: #{decoder_forward.1} parent=1 // pred_fallthru
      _
    %v94 = vld [vmem:[#allocation2] sm:$0xff]
    %v95 = vpack.c.bf16 %v94, %v94
    %v96 = vld [vmem:[#allocation4] sm:$0xf]
    %v97 = vld [vmem:[#allocation4 + $0x4] sm:$0xf]
    %v98 = vld [vmem:[#allocation4 + $0x8] sm:$0xf]
    %v99 = vld [vmem:[#allocation4 + $0xc] sm:$0xf]
    %v104 = vunpack.c.l.b16 %v96
    %v105 = vunpack.c.l.b16 %v97
    %v106 = vunpack.c.l.b16 %v98
    %v107 = vunpack.c.l.b16 %v99
    %v108 = vpack.c.b16 %v105, %v104
    %v109 = vpack.c.b16 %v107, %v106
    %vm112 = vcmask 261120
    %v114 = vsel %vm112, %v95, 0
    %116 = vmatpush.bf16.msra.mxu0 0
    %117 = vmatpush.bf16.msra.mxu0 0
    %118 = vmatpush.bf16.msra.mxu0 0
    %119 = vmatpush.bf16.msra.mxu0 0
    %120 = vmatpush.bf16.msra.mxu0 0
    %121 = vmatpush.bf16.msra.mxu0 0
    %122 = vmatpush.bf16.msra.mxu0 %v109
    %123 = vmatpush.bf16.msra.mxu0 %v108
    %124 = vmatmul.bf16.gmra.mxu0 %v114
    %v125 = vpop.f32.mrf.mxu0
    %v126 = vadd.f32 0.0, %v125
    %v127 = vpop.f32.mrf.mxu0
    %128 = vdwg.mxu0
    %v129 = vld [vmem:[%s2] sm:$0x1]
    %v130 = vld [vmem:[%s3] sm:$0x1]
    %v131 = vsel %vm112, %v126, 0.0
    %v132 = vrot.slane %v131, 4
    %v133 = vadd.f32 %v131, %v132
    %v134 = vrot.slane %v133, 2
    %v135 = vadd.f32 %v133, %v134
    %v136 = vrot.slane %v135, 1
    %v137 = vadd.f32 %v135, %v136
    %v138 = vrcp.pop 8.0
    %v139 = vmul.f32 8.0, %v138
    %v140 = vsub.f32 1.0, %v139
    %v141 = vmul.f32 %v138, %v140
    %v142 = vadd.f32 %v138, %v141
    %vm143 = vweird.f32 %v138
    %v144 = vsel %vm143, %v138, %v142
    %v145 = vmul.f32 %v137, %v144
    %v146 = vmul.f32 %v126, %v126
    %v147 = vsel %vm112, %v146, 0.0
    %v148 = vrot.slane %v147, 4
    %v149 = vadd.f32 %v147, %v148
    %v150 = vrot.slane %v149, 2
    %v151 = vadd.f32 %v149, %v150
    %v152 = vrot.slane %v151, 1
    %v153 = vadd.f32 %v151, %v152
    %v154 = vmul.f32 %v153, %v144
    %v155 = vmul.f32 %v145, %v145
    %v156 = vsub.f32 %v154, %v155
    %v157 = vmax.f32 %v156, 0.0
    %v158 = vadd.f32 %v157, 1e-05
    %v159 = vrsqrt.pop %v158
    %v160 = vmul.f32 %v159, %v158
    %v161 = vmul.f32 %v160, %v159
    %v162 = vmul.f32 0.5, %v161
    %v163 = vsub.f32 1.5, %v162
    %v164 = vmul.f32 %v159, %v163
    %vm165 = vweird.f32 %v158
    %vm166 = vweird.f32 %v159
    %vm167 = vmor %vm165, %vm166
    %v168 = vsel %vm167, %v159, %v164
    %v169 = vmul.f32 %v129, %v168
    %v170 = vmul.f32 %v145, %v169
    %v171 = vsub.f32 %v130, %v170
    %v173 = vperm.slane %v169, 0
    %v175 = vmul.f32 %v126, %v173
    %v177 = vperm.slane %v171, 0
    %v179 = vadd.f32 %v175, %v177
    %v180 = vmax.f32 %v179, 0.0
    %v181 = vpack.c.bf16 %v180, %v180
    %v182 = vld [vmem:[#allocation6] sm:$0xf]
    %v183 = vld [vmem:[#allocation6 + $0x4] sm:$0xf]
    %v184 = vld [vmem:[#allocation6 + $0x8] sm:$0xf]
    %v185 = vld [vmem:[#allocation6 + $0xc] sm:$0xf]
    %v190 = vunpack.c.l.b16 %v182
    %v191 = vunpack.c.l.b16 %v183
    %v192 = vunpack.c.l.b16 %v184
    %v193 = vunpack.c.l.b16 %v185
    %v194 = vpack.c.b16 %v191, %v190
    %v195 = vpack.c.b16 %v193, %v192
    %v199 = vsel %vm112, %v181, 0
    %201 = vmatpush.bf16.msra.mxu0 0
    %202 = vmatpush.bf16.msra.mxu0 0
    %203 = vmatpush.bf16.msra.mxu0 0
    %204 = vmatpush.bf16.msra.mxu0 0
    %205 = vmatpush.bf16.msra.mxu0 0
    %206 = vmatpush.bf16.msra.mxu0 0
    %207 = vmatpush.bf16.msra.mxu0 %v195
    %208 = vmatpush.bf16.msra.mxu0 %v194
    %209 = vmatmul.bf16.gmra.mxu0 %v199
    %v210 = vpop.f32.mrf.mxu0
    %v211 = vadd.f32 0.0, %v210
    %v212 = vpop.f32.mrf.mxu0
    %213 = vdwg.mxu0
    %v214 = vld [vmem:[%s5] sm:$0x1]
    %v215 = vld [vmem:[%s6] sm:$0x1]
    %v216 = vsel %vm112, %v211, 0.0
    %v217 = vrot.slane %v216, 4
    %v218 = vadd.f32 %v216, %v217
    %v219 = vrot.slane %v218, 2
    %v220 = vadd.f32 %v218, %v219
    %v221 = vrot.slane %v220, 1
    %v222 = vadd.f32 %v220, %v221
    %v223 = vmul.f32 %v222, %v144
    %v224 = vmul.f32 %v211, %v211
    %v225 = vsel %vm112, %v224, 0.0
    %v226 = vrot.slane %v225, 4
    %v227 = vadd.f32 %v225, %v226
    %v228 = vrot.slane %v227, 2
    %v229 = vadd.f32 %v227, %v228
    %v230 = vrot.slane %v229, 1
    %v231 = vadd.f32 %v229, %v230
    %v232 = vmul.f32 %v231, %v144
    %v233 = vmul.f32 %v223, %v223
    %v234 = vsub.f32 %v232, %v233
    %v235 = vmax.f32 %v234, 0.0
    %v236 = vadd.f32 %v235, 1e-05
    %v237 = vrsqrt.pop %v236
    %v238 = vmul.f32 %v237, %v236
    %v239 = vmul.f32 %v238, %v237
    %v240 = vmul.f32 0.5, %v239
    %v241 = vsub.f32 1.5, %v240
    %v242 = vmul.f32 %v237, %v241
    %vm243 = vweird.f32 %v236
    %vm244 = vweird.f32 %v237
    %vm245 = vmor %vm243, %vm244
    %v246 = vsel %vm245, %v237, %v242
    %v247 = vmul.f32 %v214, %v246
    %v248 = vmul.f32 %v223, %v247
    %v249 = vsub.f32 %v215, %v248
    %v251 = vperm.slane %v247, 0
    %v253 = vmul.f32 %v211, %v251
    %v255 = vperm.slane %v249, 0
    %v257 = vadd.f32 %v253, %v255
    %v258 = vmax.f32 %v257, 0.0
    %v259 = vpack.c.bf16 %v258, %v258
    %v260 = vld [vmem:[#allocation7] sm:$0xf]
    %v261 = vld [vmem:[#allocation7 + $0x4] sm:$0xf]
    %v262 = vld [vmem:[#allocation7 + $0x8] sm:$0xf]
    %v263 = vld [vmem:[#allocation7 + $0xc] sm:$0xf]
    %v264 = vld [vmem:[%s8] sm:$0x1]
    %v266 = vperm.slane %v264, 0
    %v272 = vunpack.c.l.b16 %v260
    %v273 = vunpack.c.l.b16 %v261
    %v274 = vunpack.c.l.b16 %v262
    %v275 = vunpack.c.l.b16 %v263
    %v276 = vpack.c.b16 %v273, %v272
    %v277 = vpack.c.b16 %v275, %v274
    %v281 = vsel %vm112, %v259, 0
    %283 = vmatpush.bf16.msra.mxu0 0
    %284 = vmatpush.bf16.msra.mxu0 0
    %285 = vmatpush.bf16.msra.mxu0 0
    %286 = vmatpush.bf16.msra.mxu0 0
    %287 = vmatpush.bf16.msra.mxu0 0
    %288 = vmatpush.bf16.msra.mxu0 0
    %289 = vmatpush.bf16.msra.mxu0 %v277
    %290 = vmatpush.bf16.msra.mxu0 %v276
    %291 = vmatmul.bf16.gmra.mxu0 %v281
    %v292 = vpop.f32.mrf.mxu0
    %v293 = vadd.f32 %v266, %v292
    %v294 = vpop.f32.mrf.mxu0
    %295 = vdwg.mxu0
    %296 = vst.msk [vmem:[%s9] sm:$0xff] %vm112, %v293
    // Predicated region
    $region54: #{decoder_forward.1} parent=1 // pred_check
      _
    $region55: #{decoder_forward.1} parent=1 // pred_check_branch
      %298 = sbr.rel (0) target = $region57
    $region56: #{decoder_forward.1} parent=1 // pred_region
      _
    $region57: #{decoder_forward.1} parent=1 // pred_fallthru
      _
    // Predicated region
    $region58: #{decoder_forward.1} parent=1 // pred_check
      _
    $region59: #{decoder_forward.1} parent=1 // pred_check_branch
      %300 = sbr.rel (0) target = $region61
    $region60: #{decoder_forward.1} parent=1 // pred_region
      _
    $region61: #{decoder_forward.1} parent=1 // pred_fallthru
      _
    %301 = vsyncpa [#allocation3], 1
    %302 = vsyncpa [#allocation5], 1
    %303 = vsyncpa [#allocation8], 1

</llo_original>
